<compile_context>
chip_gen: v7x
topology: tpu7x:2x2x1
jax: 0.10.0
libtpu: 0.0.40
codegen_flags: <defaults>
</compile_context>

<pallas_src>
import jax
import jax.numpy as jnp
from jax.experimental import pallas as pl
from jax.experimental.pallas import tpu as pltpu
from typing import NamedTuple

EMBEDDING_DIM = 32  # stand-in for constants.EMBEDDING_DIM (small test size)


def _round_up(x, n):
    return -(-x // n) * n


def _mlp_kernel(x_ref, w1_ref, b1_ref, w2_ref, b2_ref, o_ref):
    # x streamed in its native dtype; cast to bf16 in-register so both matmuls
    # run bf16 on the MXU with f32 accumulation.
    x = x_ref[...].astype(jnp.bfloat16)
    h = jnp.dot(x, w1_ref[...], preferred_element_type=jnp.float32)
    h = jnp.maximum(h + b1_ref[...], 0.0)          # bias + ReLU in f32
    # TODO(synk): dropout path (self.dropout) omitted — module default is None.
    o = jnp.dot(h.astype(jnp.bfloat16), w2_ref[...],
                preferred_element_type=jnp.float32)
    o_ref[...] = (o + b2_ref[...]).astype(o_ref.dtype)


class MLPParams(NamedTuple):
    d: int
    pack: int
    dp: int
    w1: jax.Array   # (dp, dp) bf16 block-diagonal
    b1: jax.Array   # (1, dp)  f32
    w2: jax.Array   # (dp, dp) bf16 block-diagonal
    b2: jax.Array   # (1, dp)  f32


def _tpu_info():
    """(vmem_capacity_bytes, is_v5) with safe fallbacks."""
    vmem = 64 << 20   # conservative fallback (v7x per-core VMEM)
    is_v5 = False
    try:
        vmem = int(pltpu.get_tpu_info().vmem_capacity_bytes)
    except Exception:
        pass
    try:
        is_v5 = "v5" in jax.devices()[0].device_kind.lower()
    except Exception:
        pass
    return vmem, is_v5


def prepare_mlp_params(w1, b1, w2, b2, *, pack=None):
    """One-time (per parameter set) packing.

    Packs `pack` logical D-wide rows into one physical row and builds
    block-diagonal weights so the lane dim is a full 128 (v5e) / 256 (v6e/v7x)
    wide.  Done once here so nothing is re-materialised every forward call.
    Weights stored as (in, out) == PyTorch weight.T.
    """
    d = w1.shape[0]
    assert w1.shape == (d, d) and w2.shape == (d, d)
    if pack is None:
        _, is_v5 = _tpu_info()
        dp_target = 128 if is_v5 else 256   # v5e MXU 128-deep; v6e/v7x 256
        pack = dp_target // d if (d < dp_target and dp_target % d == 0) else 1
    dp = d * pack
    if pack > 1:
        eye = jnp.eye(pack, dtype=jnp.float32)
        w1p = jnp.kron(eye, w1.astype(jnp.float32))    # (dp, dp) block-diagonal
        w2p = jnp.kron(eye, w2.astype(jnp.float32))
        b1p = jnp.tile(b1.astype(jnp.float32), pack)
        b2p = jnp.tile(b2.astype(jnp.float32), pack)
    else:
        w1p, w2p = w1.astype(jnp.float32), w2.astype(jnp.float32)
        b1p, b2p = b1.astype(jnp.float32), b2.astype(jnp.float32)
    return MLPParams(d=d, pack=pack, dp=dp,
                     w1=w1p.astype(jnp.bfloat16), b1=b1p.reshape(1, dp),
                     w2=w2p.astype(jnp.bfloat16), b2=b2p.reshape(1, dp))


def mlp_forward(x, params: MLPParams, *, block_rows=4096, out_dtype=None):
    """out = relu(x @ W1 + b1) @ W2 + b2, same shape/dtype as x (unless out_dtype)."""
    d, pack, dp = params.d, params.pack, params.dp
    assert x.shape[-1] == d
    out_dtype = x.dtype if out_dtype is None else out_dtype
    orig_shape = x.shape
    x2d = x.reshape(-1, d)
    m = x2d.shape[0]

    # Pad rows only to `pack` alignment (no-op when m % pack == 0).  The grid
    # handles the ragged row tail with a masked partial last block instead of
    # a tile-aligned full-array pad + post-kernel slice.
    mp = pl.cdiv(m, pack)            # packed (physical) rows
    m_pad = mp * pack
    if m_pad != m:
        x2d = jnp.pad(x2d, ((0, m_pad - m), (0, 0)))
    x_packed = x2d.reshape(mp, dp)   # free row-major metadata reshape

    # ---- Generation-aware row tile: multi-MiB per grid step.
    vmem_cap, _ = _tpu_info()
    budget = min(24 << 20, vmem_cap // 4)      # v7x -> 16 MiB, v5e/v6e -> 24 MiB
    in_bytes = jnp.dtype(x_packed.dtype).itemsize
    out_bytes = jnp.dtype(out_dtype).itemsize
    weight_bytes = 2 * (dp * dp * 2) * 2 + 2 * (dp * 4) * 2      # dbl-buffered
    per_row = dp * (2 * in_bytes + 2 * out_bytes + 12)           # dbl-buf io + temps
    tm = max(16, (max(0, budget - weight_bytes)) // per_row)
    tm = min(tm, block_rows, _round_up(mp, 16))
    # give both v7x TensorCores work when one tile would cover every row
    if pl.cdiv(mp, tm) < 2 and mp > 32:
        tm = _round_up(pl.cdiv(mp, 2), 16)
    tm = max(16, (tm // 16) * 16)
    grid = (pl.cdiv(mp, tm),)

    cost = pl.CostEstimate(
        flops=4 * mp * dp * dp,                 # two dp-wide block-diag matmuls
        transcendentals=0,
        bytes_accessed=(mp * dp * in_bytes + mp * dp * out_bytes
                        + 2 * dp * dp * 2 + 2 * dp * 4),
    )

    out = pl.pallas_call(
        _mlp_kernel,
        out_shape=jax.ShapeDtypeStruct((mp, dp), out_dtype),
        grid=grid,
        in_specs=[
            pl.BlockSpec((tm, dp), lambda i: (i, 0)),   # x tile (streamed)
            # grid-invariant weights/biases (small; kept resident by Pallas —
            # single-buffering them would only trim ~0.5 MiB, skipped for
            # portability).
            pl.BlockSpec((dp, dp), lambda i: (0, 0)),   # W1
            pl.BlockSpec((1, dp), lambda i: (0, 0)),    # b1
            pl.BlockSpec((dp, dp), lambda i: (0, 0)),   # W2
            pl.BlockSpec((1, dp), lambda i: (0, 0)),    # b2
        ],
        out_specs=pl.BlockSpec((tm, dp), lambda i: (i, 0)),
        compiler_params=pltpu.CompilerParams(
            dimension_semantics=("parallel",),
            vmem_limit_bytes=int(min(vmem_cap // 2, 64 << 20))),
        cost_estimate=cost,
    )(x_packed, params.w1, params.b1, params.w2, params.b2)

    out = out.reshape(m_pad, d)
    if m_pad != m:
        out = out[:m]
    return out.reshape(orig_shape)


def make_params(key, d):
    """Deterministic params, PyTorch-Linear-style uniform(-1/sqrt(d), 1/sqrt(d)).
    Weights stored as (in, out) == PyTorch weight.T."""
    k1, k2, k3, k4 = jax.random.split(key, 4)
    bound = 1.0 / jnp.sqrt(d)
    w1 = jax.random.uniform(k1, (d, d), jnp.float32, -bound, bound)
    b1 = jax.random.uniform(k2, (d,), jnp.float32, -bound, bound)
    w2 = jax.random.uniform(k3, (d, d), jnp.float32, -bound, bound)
    b2 = jax.random.uniform(k4, (d,), jnp.float32, -bound, bound)
    return w1, b1, w2, b2


if __name__ == "__main__":
    key = jax.random.PRNGKey(0)
    kx, kp = jax.random.split(key)

    batch, seq, d = 2, 8, EMBEDDING_DIM
    x = jax.random.normal(kx, (batch, seq, d), jnp.float32)
    w1, b1, w2, b2 = make_params(kp, d)

    params = prepare_mlp_params(w1, b1, w2, b2)   # one-time weight packing
    out = jax.block_until_ready(mlp_forward(x, params))
    assert out.shape == x.shape
    assert out.dtype == x.dtype

    # Reference with matching bf16 matmul operands / f32 accumulation.
    xb = x.astype(jnp.bfloat16)
    w1b = w1.astype(jnp.bfloat16)
    w2b = w2.astype(jnp.bfloat16)
    h = jnp.maximum(jnp.dot(xb, w1b, preferred_element_type=jnp.float32) + b1, 0.0)
    ref_bf16 = jnp.dot(h.astype(jnp.bfloat16), w2b,
                       preferred_element_type=jnp.float32) + b2
    ref_f32 = jnp.maximum(x @ w1 + b1, 0.0) @ w2 + b2

    assert jnp.allclose(out, ref_bf16, atol=2e-3, rtol=2e-2), \
        float(jnp.max(jnp.abs(out - ref_bf16)))
    assert jnp.allclose(out, ref_f32, atol=5e-2, rtol=5e-2), \
        float(jnp.max(jnp.abs(out - ref_f32)))

    print("KERNEL_OK")
</pallas_src>

<mosaic_0001>
module attributes {stable_mosaic.version = 11 : i64} {
  func.func @_mlp_kernel(%arg0: i32, %arg1: memref<16x256xf32, #tpu.memory_space<vmem>>, %arg2: memref<256x256xbf16, #tpu.memory_space<vmem>>, %arg3: memref<1x256xf32, #tpu.memory_space<vmem>>, %arg4: memref<256x256xbf16, #tpu.memory_space<vmem>>, %arg5: memref<1x256xf32, #tpu.memory_space<vmem>>, %arg6: memref<16x256xf32, #tpu.memory_space<vmem>>) attributes {dimension_semantics = [#tpu.dimension_semantics<parallel>], iteration_bounds = array<i64: 1>, scalar_prefetch = 0 : i64, scratch_operands = 0 : i64, tpu.core_type = #tpu.core_type<tc>, window_params = [{transform_indices = @transform_0, window_bounds = array<i64: 16, 256>}, {pipeline_mode = #tpu.pipeline_mode<synchronous>, transform_indices = @transform_1, window_bounds = array<i64: 256, 256>}, {pipeline_mode = #tpu.pipeline_mode<synchronous>, transform_indices = @transform_2, window_bounds = array<i64: 1, 256>}, {pipeline_mode = #tpu.pipeline_mode<synchronous>, transform_indices = @transform_3, window_bounds = array<i64: 256, 256>}, {pipeline_mode = #tpu.pipeline_mode<synchronous>, transform_indices = @transform_4, window_bounds = array<i64: 1, 256>}, {transform_indices = @transform_5, window_bounds = array<i64: 16, 256>}]} {
    %c0 = arith.constant 0 : index
    %c0_0 = arith.constant 0 : index
    %0 = vector.load %arg1[%c0, %c0_0] : memref<16x256xf32, #tpu.memory_space<vmem>>, vector<16x256xf32>
    %1 = arith.truncf %0 : vector<16x256xf32> to vector<16x256xbf16>
    %c0_1 = arith.constant 0 : index
    %c0_2 = arith.constant 0 : index
    %2 = vector.load %arg2[%c0_1, %c0_2] : memref<256x256xbf16, #tpu.memory_space<vmem>>, vector<256x256xbf16>
    %cst = arith.constant dense<0.000000e+00> : vector<16x256xf32>
    %3 = tpu.matmul %1, %2, %cst {dimension_numbers = #tpu.dot_dimension_numbers<[1], [0], [0], [1], [0, 0, 1, 1], [], []>} : vector<16x256xbf16>, vector<256x256xbf16>, vector<16x256xf32> -> vector<16x256xf32>
    %c0_3 = arith.constant 0 : index
    %c0_4 = arith.constant 0 : index
    %4 = vector.load %arg3[%c0_3, %c0_4] : memref<1x256xf32, #tpu.memory_space<vmem>>, vector<1x256xf32>
    %5 = vector.broadcast %4 : vector<1x256xf32> to vector<16x256xf32>
    %6 = arith.addf %3, %5 : vector<16x256xf32>
    %cst_5 = arith.constant 0.000000e+00 : f32
    %7 = vector.broadcast %cst_5 : f32 to vector<16x256xf32>
    %8 = arith.maximumf %6, %7 : vector<16x256xf32>
    %9 = arith.truncf %8 : vector<16x256xf32> to vector<16x256xbf16>
    %c0_6 = arith.constant 0 : index
    %c0_7 = arith.constant 0 : index
    %10 = vector.load %arg4[%c0_6, %c0_7] : memref<256x256xbf16, #tpu.memory_space<vmem>>, vector<256x256xbf16>
    %cst_8 = arith.constant dense<0.000000e+00> : vector<16x256xf32>
    %11 = tpu.matmul %9, %10, %cst_8 {dimension_numbers = #tpu.dot_dimension_numbers<[1], [0], [0], [1], [0, 0, 1, 1], [], []>} : vector<16x256xbf16>, vector<256x256xbf16>, vector<16x256xf32> -> vector<16x256xf32>
    %c0_9 = arith.constant 0 : index
    %c0_10 = arith.constant 0 : index
    %12 = vector.load %arg5[%c0_9, %c0_10] : memref<1x256xf32, #tpu.memory_space<vmem>>, vector<1x256xf32>
    %13 = vector.broadcast %12 : vector<1x256xf32> to vector<16x256xf32>
    %14 = arith.addf %11, %13 : vector<16x256xf32>
    %c0_11 = arith.constant 0 : index
    %c0_12 = arith.constant 0 : index
    %15 = vector.load %arg6[%c0_11, %c0_12] : memref<16x256xf32, #tpu.memory_space<vmem>>, vector<16x256xf32>
    tpu.vector_store %arg6[%c0_11, %c0_12], %14 {strides = array<i32>} : memref<16x256xf32, #tpu.memory_space<vmem>>, vector<16x256xf32>,
    return
  }
  func.func @transform_0(%arg0: i32) -> (i32, i32) {
    %c0_i32 = arith.constant 0 : i32
    %c0_i32_0 = arith.constant 0 : i32
    return %arg0, %c0_i32 : i32, i32
  }
  func.func @transform_1(%arg0: i32) -> (i32, i32) {
    %c0_i32 = arith.constant 0 : i32
    %c0_i32_0 = arith.constant 0 : i32
    %c0_i32_1 = arith.constant 0 : i32
    return %c0_i32, %c0_i32_0 : i32, i32
  }
  func.func @transform_2(%arg0: i32) -> (i32, i32) {
    %c0_i32 = arith.constant 0 : i32
    %c0_i32_0 = arith.constant 0 : i32
    %c0_i32_1 = arith.constant 0 : i32
    return %c0_i32, %c0_i32_0 : i32, i32
  }
  func.func @transform_3(%arg0: i32) -> (i32, i32) {
    %c0_i32 = arith.constant 0 : i32
    %c0_i32_0 = arith.constant 0 : i32
    %c0_i32_1 = arith.constant 0 : i32
    return %c0_i32, %c0_i32_0 : i32, i32
  }
  func.func @transform_4(%arg0: i32) -> (i32, i32) {
    %c0_i32 = arith.constant 0 : i32
    %c0_i32_0 = arith.constant 0 : i32
    %c0_i32_1 = arith.constant 0 : i32
    return %c0_i32, %c0_i32_0 : i32, i32
  }
  func.func @transform_5(%arg0: i32) -> (i32, i32) {
    %c0_i32 = arith.constant 0 : i32
    %c0_i32_0 = arith.constant 0 : i32
    return %arg0, %c0_i32 : i32, i32
  }
}

</mosaic_0001>

<llo_original>
// kernel: tpu_custom_call.1
$region0: #{tpu_custom_call.1}
  #allocation0 [shape = 'u32[]', space=smem, size = 0x4, offset = 0x4, fixed_abs, tag = 'smem constant byte address 0x4 - core index']
  #allocation1 [shape = 'u32[144,128]{1,0:T(1,128)}', space=vmem, size = 0x12000, scoped, tag = 'internal scratch']
  %s0 = inlined_call_operand.hbm [shape: f32[2,256], index: 0, kind: input, shape index: {}]
  %s1 = inlined_call_operand.hbm [shape: bf16[256,256], index: 1, kind: input, shape index: {}]
  %s2 = inlined_call_operand.vmem [shape: f32[1,256], index: 2, kind: input, shape index: {}]
  %s3 = inlined_call_operand.hbm [shape: bf16[256,256], index: 3, kind: input, shape index: {}]
  %s4 = inlined_call_operand.vmem [shape: f32[1,256], index: 4, kind: input, shape index: {}]
  %s5 = inlined_call_operand.hbm [shape: f32[2,256], index: 5, kind: output, shape index: {}]
  %s6 = sld [smem:[#allocation0]]
  $region42: #{tpu_custom_call.1} parent=0
    _
  %s8 = ssub.s32 1, %s6
  %s9 = scalar_select 0, %s8, %s6
  $region1: #{tpu_custom_call.1} parent=0
    #allocation2 [shape = 'u8[16384]{0}', space=vmem, size = 0x4000, scoped, tag = 'input window, operand 0, single buffered']
    #allocation3 [shape = 's32[1]{0}', space=sflag, size = 0x4, scoped, tag = 'scoped memory for tpu_custom_call.1']
    #allocation4 [shape = 's32[1]{0}', space=sflag, size = 0x4, scoped, tag = 'scoped memory for tpu_custom_call.1']
    #allocation5 [shape = 'u8[131072]{0}', space=vmem, size = 0x20000, scoped, tag = 'input window, operand 1, single buffered']
    #allocation6 [shape = 's32[1]{0}', space=sflag, size = 0x4, scoped, tag = 'scoped memory for tpu_custom_call.1']
    #allocation7 [shape = 'u8[131072]{0}', space=vmem, size = 0x20000, scoped, tag = 'input window, operand 3, single buffered']
    #allocation8 [shape = 'u8[16384]{0}', space=vmem, size = 0x4000, scoped, tag = 'output window, operand 0, single buffered']
    %10 = vsyncpa [#allocation3], 0
    %11 = vsyncpa [#allocation6], 0
    %12 = vsyncpa [#allocation4], 0
    // Predicated region
    $region2: #{tpu_custom_call.1} parent=1 // pred_check
      _
    $region3: #{tpu_custom_call.1} parent=1 // pred_check_branch
      %14 = sbr.rel (0) target = $region5
    $region4: #{tpu_custom_call.1} parent=1 // pred_region
      %s16 = ssub.s32 512, 64
      %17 = vsyncadd [#allocation3], %s16
      %s18 = sshll.u32 [#allocation2], 4
      %s19 = int_to_ptr.vmem [resolvable:$true] %s18
      %24 = dma.hbm_to_vmem [thread:$0]  %s0, 64, %s19, [#allocation3], 64, 64, 4
    $region5: #{tpu_custom_call.1} parent=1 // pred_fallthru
      _
    // Predicated region
    $region6: #{tpu_custom_call.1} parent=1 // pred_check
      _
    $region7: #{tpu_custom_call.1} parent=1 // pred_check_branch
      %26 = sbr.rel (0) target = $region9
    $region8: #{tpu_custom_call.1} parent=1 // pred_region
      %s28 = ssub.s32 4096, 4096
      %29 = vsyncadd [#allocation6], %s28
      %s30 = sshll.u32 [#allocation5], 4
      %s31 = int_to_ptr.vmem [resolvable:$true] %s30
      %36 = dma.hbm_to_vmem [thread:$0]  %s1, 4096, %s31, [#allocation6], 128, 128, 8
    $region9: #{tpu_custom_call.1} parent=1 // pred_fallthru
      _
    // Predicated region
    $region10: #{tpu_custom_call.1} parent=1 // pred_check
      _
    $region11: #{tpu_custom_call.1} parent=1 // pred_check_branch
      %38 = sbr.rel (0) target = $region13
    $region12: #{tpu_custom_call.1} parent=1 // pred_region
      _
    $region13: #{tpu_custom_call.1} parent=1 // pred_fallthru
      _
    // Predicated region
    $region14: #{tpu_custom_call.1} parent=1 // pred_check
      _
    $region15: #{tpu_custom_call.1} parent=1 // pred_check_branch
      %40 = sbr.rel (0) target = $region17
    $region16: #{tpu_custom_call.1} parent=1 // pred_region
      %s42 = ssub.s32 4096, 4096
      %43 = vsyncadd [#allocation6], %s42
      %s44 = sshll.u32 [#allocation7], 4
      %s45 = int_to_ptr.vmem [resolvable:$true] %s44
      %50 = dma.hbm_to_vmem [thread:$0]  %s3, 4096, %s45, [#allocation6], 128, 128, 8
    $region17: #{tpu_custom_call.1} parent=1 // pred_fallthru
      _
    // Predicated region
    $region18: #{tpu_custom_call.1} parent=1 // pred_check
      _
    $region19: #{tpu_custom_call.1} parent=1 // pred_check_branch
      %52 = sbr.rel (0) target = $region21
    $region20: #{tpu_custom_call.1} parent=1 // pred_region
      _
    $region21: #{tpu_custom_call.1} parent=1 // pred_fallthru
      _
    // Predicated region
    $region22: #{tpu_custom_call.1} parent=1 // pred_check
      _
    $region23: #{tpu_custom_call.1} parent=1 // pred_check_branch
      %54 = sbr.rel (0) target = $region25
    $region24: #{tpu_custom_call.1} parent=1 // pred_region
      %55 = dma.done [#allocation3], 512
    $region25: #{tpu_custom_call.1} parent=1 // pred_fallthru
      _
    // Predicated region
    $region26: #{tpu_custom_call.1} parent=1 // pred_check
      _
    $region27: #{tpu_custom_call.1} parent=1 // pred_check_branch
      %57 = sbr.rel (0) target = $region29
    $region28: #{tpu_custom_call.1} parent=1 // pred_region
      %58 = dma.done [#allocation6], 4096
    $region29: #{tpu_custom_call.1} parent=1 // pred_fallthru
      _
    // Predicated region
    $region30: #{tpu_custom_call.1} parent=1 // pred_check
      _
    $region31: #{tpu_custom_call.1} parent=1 // pred_check_branch
      %60 = sbr.rel (0) target = $region33
    $region32: #{tpu_custom_call.1} parent=1 // pred_region
      %61 = dma.done [#allocation6], 4096
    $region33: #{tpu_custom_call.1} parent=1 // pred_fallthru
      _
    %v62 = vld [vmem:[#allocation2] sm:$0xf]
    %v63 = vld [vmem:[#allocation2 + $0x4] sm:$0xf]
    %v64 = vld [vmem:[#allocation2 + $0x8] sm:$0xf]
    %v65 = vld [vmem:[#allocation2 + $0xc] sm:$0xf]
    %v66 = vld [vmem:[#allocation2 + $0x10] sm:$0xf]
    %v67 = vld [vmem:[#allocation2 + $0x14] sm:$0xf]
    %v68 = vld [vmem:[#allocation2 + $0x18] sm:$0xf]
    %v69 = vld [vmem:[#allocation2 + $0x1c] sm:$0xf]
    %v78 = vcombine.low %v62, %v63
    %v79 = vcombine.low %v64, %v65
    %v81 = vunpack.c.l.s4 1983009808
    %v82 = vunpack.c.0.s8 %v81
    %v83 = vlaneseq
    %v84 = vshrl.u32 %v83, 7
    %v85 = vsub.s32 %v82, %v84
    %v86 = vrot.slane %v78, %v85
    %v88 = vunpack.c.l.s4 1983009808
    %v89 = vunpack.c.0.s8 %v88
    %v90 = vlaneseq
    %v91 = vshrl.u32 %v90, 7
    %v92 = vsub.s32 %v89, %v91
    %v93 = vrot.slane %v79, %v92
    %v94 = vcombine.low %v86, %v93
    %v95 = vcombine.high %v86, %v93
    %v96 = vcombine.low %v66, %v67
    %v97 = vcombine.low %v68, %v69
    %v99 = vunpack.c.l.s4 1983009808
    %v100 = vunpack.c.0.s8 %v99
    %v101 = vlaneseq
    %v102 = vshrl.u32 %v101, 7
    %v103 = vsub.s32 %v100, %v102
    %v104 = vrot.slane %v96, %v103
    %v106 = vunpack.c.l.s4 1983009808
    %v107 = vunpack.c.0.s8 %v106
    %v108 = vlaneseq
    %v109 = vshrl.u32 %v108, 7
    %v110 = vsub.s32 %v107, %v109
    %v111 = vrot.slane %v97, %v110
    %v112 = vcombine.low %v104, %v111
    %v113 = vcombine.high %v104, %v111
    %v118 = vpack.c.bf16 %v112, %v94
    %v119 = vpack.c.bf16 %v113, %v95
    %v120 = vld [vmem:[#allocation5] sm:$0xff]
    %v121 = vld [vmem:[#allocation5 + $0x8] sm:$0xff]
    %v122 = vld [vmem:[#allocation5 + $0x10] sm:$0xff]
    %v123 = vld [vmem:[#allocation5 + $0x18] sm:$0xff]
    %v124 = vld [vmem:[#allocation5 + $0x20] sm:$0xff]
    %v125 = vld [vmem:[#allocation5 + $0x28] sm:$0xff]
    %v126 = vld [vmem:[#allocation5 + $0x30] sm:$0xff]
    %v127 = vld [vmem:[#allocation5 + $0x38] sm:$0xff]
    %v128 = vld [vmem:[#allocation5 + $0x40] sm:$0xff]
    %v129 = vld [vmem:[#allocation5 + $0x48] sm:$0xff]
    %v130 = vld [vmem:[#allocation5 + $0x50] sm:$0xff]
    %v131 = vld [vmem:[#allocation5 + $0x58] sm:$0xff]
    %v132 = vld [vmem:[#allocation5 + $0x60] sm:$0xff]
    %v133 = vld [vmem:[#allocation5 + $0x68] sm:$0xff]
    %v134 = vld [vmem:[#allocation5 + $0x70] sm:$0xff]
    %v135 = vld [vmem:[#allocation5 + $0x78] sm:$0xff]
    %v136 = vld [vmem:[#allocation5 + $0x80] sm:$0xff]
    %v137 = vld [vmem:[#allocation5 + $0x88] sm:$0xff]
    %v138 = vld [vmem:[#allocation5 + $0x90] sm:$0xff]
    %v139 = vld [vmem:[#allocation5 + $0x98] sm:$0xff]
    %v140 = vld [vmem:[#allocation5 + $0xa0] sm:$0xff]
    %v141 = vld [vmem:[#allocation5 + $0xa8] sm:$0xff]
    %v142 = vld [vmem:[#allocation5 + $0xb0] sm:$0xff]
    %v143 = vld [vmem:[#allocation5 + $0xb8] sm:$0xff]
    %v144 = vld [vmem:[#allocation5 + $0xc0] sm:$0xff]
    %v145 = vld [vmem:[#allocation5 + $0xc8] sm:$0xff]
    %v146 = vld [vmem:[#allocation5 + $0xd0] sm:$0xff]
    %v147 = vld [vmem:[#allocation5 + $0xd8] sm:$0xff]
    %v148 = vld [vmem:[#allocation5 + $0xe0] sm:$0xff]
    %v149 = vld [vmem:[#allocation5 + $0xe8] sm:$0xff]
    %v150 = vld [vmem:[#allocation5 + $0xf0] sm:$0xff]
    %v151 = vld [vmem:[#allocation5 + $0xf8] sm:$0xff]
    %v152 = vld [vmem:[%s2] sm:$0x3]
    %v154 = vlaneseq
    %v155 = vshrl.u32 %v154, 7
    %v156 = vsub.s32 0, %v155
    %v157 = vrot.slane %v152, %v156
    %v158 = vlaneseq
    %v159 = vshrl.u32 %v158, 7
    %v160 = vsub.s32 1, %v159
    %v161 = vrot.slane %v152, %v160
    %v196 = vunpack.c.l.b16 %v120
    %v197 = vunpack.c.h.b16 %v120
    %v198 = vunpack.c.l.b16 %v121
    %v199 = vunpack.c.h.b16 %v121
    %v200 = vunpack.c.l.b16 %v122
    %v201 = vunpack.c.h.b16 %v122
    %v202 = vunpack.c.l.b16 %v123
    %v203 = vunpack.c.h.b16 %v123
    %v204 = vunpack.c.l.b16 %v124
    %v205 = vunpack.c.h.b16 %v124
    %v206 = vunpack.c.l.b16 %v125
    %v207 = vunpack.c.h.b16 %v125
    %v208 = vunpack.c.l.b16 %v126
    %v209 = vunpack.c.h.b16 %v126
    %v210 = vunpack.c.l.b16 %v127
    %v211 = vunpack.c.h.b16 %v127
    %v212 = vunpack.c.l.b16 %v128
    %v213 = vunpack.c.h.b16 %v128
    %v214 = vunpack.c.l.b16 %v129
    %v215 = vunpack.c.h.b16 %v129
    %v216 = vunpack.c.l.b16 %v130
    %v217 = vunpack.c.h.b16 %v130
    %v218 = vunpack.c.l.b16 %v131
    %v219 = vunpack.c.h.b16 %v131
    %v220 = vunpack.c.l.b16 %v132
    %v221 = vunpack.c.h.b16 %v132
    %v222 = vunpack.c.l.b16 %v133
    %v223 = vunpack.c.h.b16 %v133
    %v224 = vunpack.c.l.b16 %v134
    %v225 = vunpack.c.h.b16 %v134
    %v226 = vunpack.c.l.b16 %v135
    %v227 = vunpack.c.h.b16 %v135
    %v228 = vunpack.c.l.b16 %v136
    %v229 = vunpack.c.h.b16 %v136
    %v230 = vunpack.c.l.b16 %v137
    %v231 = vunpack.c.h.b16 %v137
    %v232 = vunpack.c.l.b16 %v138
    %v233 = vunpack.c.h.b16 %v138
    %v234 = vunpack.c.l.b16 %v139
    %v235 = vunpack.c.h.b16 %v139
    %v236 = vunpack.c.l.b16 %v140
    %v237 = vunpack.c.h.b16 %v140
    %v238 = vunpack.c.l.b16 %v141
    %v239 = vunpack.c.h.b16 %v141
    %v240 = vunpack.c.l.b16 %v142
    %v241 = vunpack.c.h.b16 %v142
    %v242 = vunpack.c.l.b16 %v143
    %v243 = vunpack.c.h.b16 %v143
    %v244 = vunpack.c.l.b16 %v144
    %v245 = vunpack.c.h.b16 %v144
    %v246 = vunpack.c.l.b16 %v145
    %v247 = vunpack.c.h.b16 %v145
    %v248 = vunpack.c.l.b16 %v146
    %v249 = vunpack.c.h.b16 %v146
    %v250 = vunpack.c.l.b16 %v147
    %v251 = vunpack.c.h.b16 %v147
    %v252 = vunpack.c.l.b16 %v148
    %v253 = vunpack.c.h.b16 %v148
    %v254 = vunpack.c.l.b16 %v149
    %v255 = vunpack.c.h.b16 %v149
    %v256 = vunpack.c.l.b16 %v150
    %v257 = vunpack.c.h.b16 %v150
    %v258 = vunpack.c.l.b16 %v151
    %v259 = vunpack.c.h.b16 %v151
    %v260 = vpack.c.b16 %v198, %v196
    %v261 = vpack.c.b16 %v199, %v197
    %v262 = vpack.c.b16 %v202, %v200
    %v263 = vpack.c.b16 %v203, %v201
    %v264 = vpack.c.b16 %v206, %v204
    %v265 = vpack.c.b16 %v207, %v205
    %v266 = vpack.c.b16 %v210, %v208
    %v267 = vpack.c.b16 %v211, %v209
    %v268 = vpack.c.b16 %v214, %v212
    %v269 = vpack.c.b16 %v215, %v213
    %v270 = vpack.c.b16 %v218, %v216
    %v271 = vpack.c.b16 %v219, %v217
    %v272 = vpack.c.b16 %v222, %v220
    %v273 = vpack.c.b16 %v223, %v221
    %v274 = vpack.c.b16 %v226, %v224
    %v275 = vpack.c.b16 %v227, %v225
    %v276 = vpack.c.b16 %v230, %v228
    %v277 = vpack.c.b16 %v231, %v229
    %v278 = vpack.c.b16 %v234, %v232
    %v279 = vpack.c.b16 %v235, %v233
    %v280 = vpack.c.b16 %v238, %v236
    %v281 = vpack.c.b16 %v239, %v237
    %v282 = vpack.c.b16 %v242, %v240
    %v283 = vpack.c.b16 %v243, %v241
    %v284 = vpack.c.b16 %v246, %v244
    %v285 = vpack.c.b16 %v247, %v245
    %v286 = vpack.c.b16 %v250, %v248
    %v287 = vpack.c.b16 %v251, %v249
    %v288 = vpack.c.b16 %v254, %v252
    %v289 = vpack.c.b16 %v255, %v253
    %v290 = vpack.c.b16 %v258, %v256
    %v291 = vpack.c.b16 %v259, %v257
    %324 = vmatprep.subr.bf16.mxu0 %v261
    %325 = vmatpush1.bf16.msra.mxu0 %v260
    %326 = vmatprep.subr.bf16.mxu0 %v263
    %327 = vmatpush1.bf16.msra.mxu0 %v262
    %328 = vmatprep.subr.bf16.mxu0 %v265
    %329 = vmatpush1.bf16.msra.mxu0 %v264
    %330 = vmatprep.subr.bf16.mxu0 %v267
    %331 = vmatpush1.bf16.msra.mxu0 %v266
    %332 = vmatprep.subr.bf16.mxu0 %v269
    %333 = vmatpush1.bf16.msra.mxu0 %v268
    %334 = vmatprep.subr.bf16.mxu0 %v271
    %335 = vmatpush1.bf16.msra.mxu0 %v270
    %336 = vmatprep.subr.bf16.mxu0 %v273
    %337 = vmatpush1.bf16.msra.mxu0 %v272
    %338 = vmatprep.subr.bf16.mxu0 %v275
    %339 = vmatpush1.bf16.msra.mxu0 %v274
    %340 = vmatprep.subr.bf16.mxu0 %v277
    %341 = vmatpush1.bf16.msra.mxu0 %v276
    %342 = vmatprep.subr.bf16.mxu0 %v279
    %343 = vmatpush1.bf16.msra.mxu0 %v278
    %344 = vmatprep.subr.bf16.mxu0 %v281
    %345 = vmatpush1.bf16.msra.mxu0 %v280
    %346 = vmatprep.subr.bf16.mxu0 %v283
    %347 = vmatpush1.bf16.msra.mxu0 %v282
    %348 = vmatprep.subr.bf16.mxu0 %v285
    %349 = vmatpush1.bf16.msra.mxu0 %v284
    %350 = vmatprep.subr.bf16.mxu0 %v287
    %351 = vmatpush1.bf16.msra.mxu0 %v286
    %352 = vmatprep.subr.bf16.mxu0 %v289
    %353 = vmatpush1.bf16.msra.mxu0 %v288
    %354 = vmatprep.subr.bf16.mxu0 %v291
    %355 = vmatpush1.bf16.msra.mxu0 %v290
    %356 = vmatprep.mubr.bf16.mxu0 %v119
    %357 = vmatmul.mubr.bf16.gmra.mrb[0].mxu0 %v118
    %v358 = vpop.f32.mrb[0].mxu0
    %v359 = vadd.f32 %v157, %v358
    %v360 = vpop.f32.mrb[0].mxu0
    %v361 = vadd.f32 %v161, %v360
    %v362 = vpop.f32.mrb[0].mxu0
    %v363 = vadd.f32 %v157, %v362
    %v364 = vpop.f32.mrb[0].mxu0
    %v365 = vadd.f32 %v161, %v364
    %366 = vdwg.mxu0
    %v367 = vmax.f32 %v359, 0.0
    %v368 = vmax.f32 %v361, 0.0
    %v369 = vmax.f32 %v363, 0.0
    %v370 = vmax.f32 %v365, 0.0
    %v371 = vpack.c.bf16 %v369, %v367
    %v372 = vpack.c.bf16 %v370, %v368
    %v373 = vld [vmem:[#allocation7] sm:$0xff]
    %v374 = vld [vmem:[#allocation7 + $0x8] sm:$0xff]
    %v375 = vld [vmem:[#allocation7 + $0x10] sm:$0xff]
    %v376 = vld [vmem:[#allocation7 + $0x18] sm:$0xff]
    %v377 = vld [vmem:[#allocation7 + $0x20] sm:$0xff]
    %v378 = vld [vmem:[#allocation7 + $0x28] sm:$0xff]
    %v379 = vld [vmem:[#allocation7 + $0x30] sm:$0xff]
    %v380 = vld [vmem:[#allocation7 + $0x38] sm:$0xff]
    %v381 = vld [vmem:[#allocation7 + $0x40] sm:$0xff]
    %v382 = vld [vmem:[#allocation7 + $0x48] sm:$0xff]
    %v383 = vld [vmem:[#allocation7 + $0x50] sm:$0xff]
    %v384 = vld [vmem:[#allocation7 + $0x58] sm:$0xff]
    %v385 = vld [vmem:[#allocation7 + $0x60] sm:$0xff]
    %v386 = vld [vmem:[#allocation7 + $0x68] sm:$0xff]
    %v387 = vld [vmem:[#allocation7 + $0x70] sm:$0xff]
    %v388 = vld [vmem:[#allocation7 + $0x78] sm:$0xff]
    %v389 = vld [vmem:[#allocation7 + $0x80] sm:$0xff]
    %v390 = vld [vmem:[#allocation7 + $0x88] sm:$0xff]
    %v391 = vld [vmem:[#allocation7 + $0x90] sm:$0xff]
    %v392 = vld [vmem:[#allocation7 + $0x98] sm:$0xff]
    %v393 = vld [vmem:[#allocation7 + $0xa0] sm:$0xff]
    %v394 = vld [vmem:[#allocation7 + $0xa8] sm:$0xff]
    %v395 = vld [vmem:[#allocation7 + $0xb0] sm:$0xff]
    %v396 = vld [vmem:[#allocation7 + $0xb8] sm:$0xff]
    %v397 = vld [vmem:[#allocation7 + $0xc0] sm:$0xff]
    %v398 = vld [vmem:[#allocation7 + $0xc8] sm:$0xff]
    %v399 = vld [vmem:[#allocation7 + $0xd0] sm:$0xff]
    %v400 = vld [vmem:[#allocation7 + $0xd8] sm:$0xff]
    %v401 = vld [vmem:[#allocation7 + $0xe0] sm:$0xff]
    %v402 = vld [vmem:[#allocation7 + $0xe8] sm:$0xff]
    %v403 = vld [vmem:[#allocation7 + $0xf0] sm:$0xff]
    %v404 = vld [vmem:[#allocation7 + $0xf8] sm:$0xff]
    %v405 = vld [vmem:[%s4] sm:$0x3]
    %v407 = vlaneseq
    %v408 = vshrl.u32 %v407, 7
    %v409 = vsub.s32 0, %v408
    %v410 = vrot.slane %v405, %v409
    %v411 = vlaneseq
    %v412 = vshrl.u32 %v411, 7
    %v413 = vsub.s32 1, %v412
    %v414 = vrot.slane %v405, %v413
    %v449 = vunpack.c.l.b16 %v373
    %v450 = vunpack.c.h.b16 %v373
    %v451 = vunpack.c.l.b16 %v374
    %v452 = vunpack.c.h.b16 %v374
    %v453 = vunpack.c.l.b16 %v375
    %v454 = vunpack.c.h.b16 %v375
    %v455 = vunpack.c.l.b16 %v376
    %v456 = vunpack.c.h.b16 %v376
    %v457 = vunpack.c.l.b16 %v377
    %v458 = vunpack.c.h.b16 %v377
    %v459 = vunpack.c.l.b16 %v378
    %v460 = vunpack.c.h.b16 %v378
    %v461 = vunpack.c.l.b16 %v379
    %v462 = vunpack.c.h.b16 %v379
    %v463 = vunpack.c.l.b16 %v380
    %v464 = vunpack.c.h.b16 %v380
    %v465 = vunpack.c.l.b16 %v381
    %v466 = vunpack.c.h.b16 %v381
    %v467 = vunpack.c.l.b16 %v382
    %v468 = vunpack.c.h.b16 %v382
    %v469 = vunpack.c.l.b16 %v383
    %v470 = vunpack.c.h.b16 %v383
    %v471 = vunpack.c.l.b16 %v384
    %v472 = vunpack.c.h.b16 %v384
    %v473 = vunpack.c.l.b16 %v385
    %v474 = vunpack.c.h.b16 %v385
    %v475 = vunpack.c.l.b16 %v386
    %v476 = vunpack.c.h.b16 %v386
    %v477 = vunpack.c.l.b16 %v387
    %v478 = vunpack.c.h.b16 %v387
    %v479 = vunpack.c.l.b16 %v388
    %v480 = vunpack.c.h.b16 %v388
    %v481 = vunpack.c.l.b16 %v389
    %v482 = vunpack.c.h.b16 %v389
    %v483 = vunpack.c.l.b16 %v390
    %v484 = vunpack.c.h.b16 %v390
    %v485 = vunpack.c.l.b16 %v391
    %v486 = vunpack.c.h.b16 %v391
    %v487 = vunpack.c.l.b16 %v392
    %v488 = vunpack.c.h.b16 %v392
    %v489 = vunpack.c.l.b16 %v393
    %v490 = vunpack.c.h.b16 %v393
    %v491 = vunpack.c.l.b16 %v394
    %v492 = vunpack.c.h.b16 %v394
    %v493 = vunpack.c.l.b16 %v395
    %v494 = vunpack.c.h.b16 %v395
    %v495 = vunpack.c.l.b16 %v396
    %v496 = vunpack.c.h.b16 %v396
    %v497 = vunpack.c.l.b16 %v397
    %v498 = vunpack.c.h.b16 %v397
    %v499 = vunpack.c.l.b16 %v398
    %v500 = vunpack.c.h.b16 %v398
    %v501 = vunpack.c.l.b16 %v399
    %v502 = vunpack.c.h.b16 %v399
    %v503 = vunpack.c.l.b16 %v400
    %v504 = vunpack.c.h.b16 %v400
    %v505 = vunpack.c.l.b16 %v401
    %v506 = vunpack.c.h.b16 %v401
    %v507 = vunpack.c.l.b16 %v402
    %v508 = vunpack.c.h.b16 %v402
    %v509 = vunpack.c.l.b16 %v403
    %v510 = vunpack.c.h.b16 %v403
    %v511 = vunpack.c.l.b16 %v404
    %v512 = vunpack.c.h.b16 %v404
    %v513 = vpack.c.b16 %v451, %v449
    %v514 = vpack.c.b16 %v452, %v450
    %v515 = vpack.c.b16 %v455, %v453
    %v516 = vpack.c.b16 %v456, %v454
    %v517 = vpack.c.b16 %v459, %v457
    %v518 = vpack.c.b16 %v460, %v458
    %v519 = vpack.c.b16 %v463, %v461
    %v520 = vpack.c.b16 %v464, %v462
    %v521 = vpack.c.b16 %v467, %v465
    %v522 = vpack.c.b16 %v468, %v466
    %v523 = vpack.c.b16 %v471, %v469
    %v524 = vpack.c.b16 %v472, %v470
    %v525 = vpack.c.b16 %v475, %v473
    %v526 = vpack.c.b16 %v476, %v474
    %v527 = vpack.c.b16 %v479, %v477
    %v528 = vpack.c.b16 %v480, %v478
    %v529 = vpack.c.b16 %v483, %v481
    %v530 = vpack.c.b16 %v484, %v482
    %v531 = vpack.c.b16 %v487, %v485
    %v532 = vpack.c.b16 %v488, %v486
    %v533 = vpack.c.b16 %v491, %v489
    %v534 = vpack.c.b16 %v492, %v490
    %v535 = vpack.c.b16 %v495, %v493
    %v536 = vpack.c.b16 %v496, %v494
    %v537 = vpack.c.b16 %v499, %v497
    %v538 = vpack.c.b16 %v500, %v498
    %v539 = vpack.c.b16 %v503, %v501
    %v540 = vpack.c.b16 %v504, %v502
    %v541 = vpack.c.b16 %v507, %v505
    %v542 = vpack.c.b16 %v508, %v506
    %v543 = vpack.c.b16 %v511, %v509
    %v544 = vpack.c.b16 %v512, %v510
    %577 = vmatprep.subr.bf16.mxu0 %v514
    %578 = vmatpush1.bf16.msra.mxu0 %v513
    %579 = vmatprep.subr.bf16.mxu0 %v516
    %580 = vmatpush1.bf16.msra.mxu0 %v515
    %581 = vmatprep.subr.bf16.mxu0 %v518
    %582 = vmatpush1.bf16.msra.mxu0 %v517
    %583 = vmatprep.subr.bf16.mxu0 %v520
    %584 = vmatpush1.bf16.msra.mxu0 %v519
    %585 = vmatprep.subr.bf16.mxu0 %v522
    %586 = vmatpush1.bf16.msra.mxu0 %v521
    %587 = vmatprep.subr.bf16.mxu0 %v524
    %588 = vmatpush1.bf16.msra.mxu0 %v523
    %589 = vmatprep.subr.bf16.mxu0 %v526
    %590 = vmatpush1.bf16.msra.mxu0 %v525
    %591 = vmatprep.subr.bf16.mxu0 %v528
    %592 = vmatpush1.bf16.msra.mxu0 %v527
    %593 = vmatprep.subr.bf16.mxu0 %v530
    %594 = vmatpush1.bf16.msra.mxu0 %v529
    %595 = vmatprep.subr.bf16.mxu0 %v532
    %596 = vmatpush1.bf16.msra.mxu0 %v531
    %597 = vmatprep.subr.bf16.mxu0 %v534
    %598 = vmatpush1.bf16.msra.mxu0 %v533
    %599 = vmatprep.subr.bf16.mxu0 %v536
    %600 = vmatpush1.bf16.msra.mxu0 %v535
    %601 = vmatprep.subr.bf16.mxu0 %v538
    %602 = vmatpush1.bf16.msra.mxu0 %v537
    %603 = vmatprep.subr.bf16.mxu0 %v540
    %604 = vmatpush1.bf16.msra.mxu0 %v539
    %605 = vmatprep.subr.bf16.mxu0 %v542
    %606 = vmatpush1.bf16.msra.mxu0 %v541
    %607 = vmatprep.subr.bf16.mxu0 %v544
    %608 = vmatpush1.bf16.msra.mxu0 %v543
    %609 = vmatprep.mubr.bf16.mxu0 %v372
    %610 = vmatmul.mubr.bf16.gmra.mrb[0].mxu0 %v371
    %v611 = vpop.f32.mrb[0].mxu0
    %v612 = vadd.f32 %v410, %v611
    %v613 = vpop.f32.mrb[0].mxu0
    %v614 = vadd.f32 %v414, %v613
    %v615 = vpop.f32.mrb[0].mxu0
    %v616 = vadd.f32 %v410, %v615
    %v617 = vpop.f32.mrb[0].mxu0
    %v618 = vadd.f32 %v414, %v617
    %619 = vdwg.mxu0
    %v624 = vcombine.low %v612, %v614
    %v625 = vcombine.high %v612, %v614
    %v627 = vunpack.c.l.s4 1983009808
    %v628 = vunpack.c.0.s8 %v627
    %v629 = vlaneseq
    %v630 = vshrl.u32 %v629, 7
    %v631 = vsub.s32 %v628, %v630
    %v632 = vrot.slane %v624, %v631
    %v634 = vunpack.c.l.s4 1983009808
    %v635 = vunpack.c.0.s8 %v634
    %v636 = vlaneseq
    %v637 = vshrl.u32 %v636, 7
    %v638 = vsub.s32 %v635, %v637
    %v639 = vrot.slane %v625, %v638
    %v640 = vcombine.high %v632, %v632
    %v641 = vcombine.high %v639, %v639
    %v642 = vcombine.low %v616, %v618
    %v643 = vcombine.high %v616, %v618
    %v645 = vunpack.c.l.s4 1983009808
    %v646 = vunpack.c.0.s8 %v645
    %v647 = vlaneseq
    %v648 = vshrl.u32 %v647, 7
    %v649 = vsub.s32 %v646, %v648
    %v650 = vrot.slane %v642, %v649
    %v652 = vunpack.c.l.s4 1983009808
    %v653 = vunpack.c.0.s8 %v652
    %v654 = vlaneseq
    %v655 = vshrl.u32 %v654, 7
    %v656 = vsub.s32 %v653, %v655
    %v657 = vrot.slane %v643, %v656
    %v658 = vcombine.high %v650, %v650
    %v659 = vcombine.high %v657, %v657
    %668 = vst [vmem:[#allocation8] sm:$0xf] %v632
    %669 = vst [vmem:[#allocation8 + $0x4] sm:$0xf] %v640
    %670 = vst [vmem:[#allocation8 + $0x8] sm:$0xf] %v639
    %671 = vst [vmem:[#allocation8 + $0xc] sm:$0xf] %v641
    %672 = vst [vmem:[#allocation8 + $0x10] sm:$0xf] %v650
    %673 = vst [vmem:[#allocation8 + $0x14] sm:$0xf] %v658
    %674 = vst [vmem:[#allocation8 + $0x18] sm:$0xf] %v657
    %675 = vst [vmem:[#allocation8 + $0x1c] sm:$0xf] %v659
    // Predicated region
    $region34: #{tpu_custom_call.1} parent=1 // pred_check
      _
    $region35: #{tpu_custom_call.1} parent=1 // pred_check_branch
      %677 = sbr.rel (0) target = $region37
    $region36: #{tpu_custom_call.1} parent=1 // pred_region
      %s679 = ssub.s32 512, 64
      %680 = vsyncadd [#allocation4], %s679
      %s681 = sshll.u32 [#allocation8], 4
      %s682 = int_to_ptr.vmem [resolvable:$true] %s681
      %687 = dma.vmem_to_hbm [thread:$0]  %s682, 64, %s5, [#allocation4], 64, 64, 4
    $region37: #{tpu_custom_call.1} parent=1 // pred_fallthru
      _
    // Predicated region
    $region38: #{tpu_custom_call.1} parent=1 // pred_check
      _
    $region39: #{tpu_custom_call.1} parent=1 // pred_check_branch
      %689 = sbr.rel (0) target = $region41
    $region40: #{tpu_custom_call.1} parent=1 // pred_region
      %690 = dma.done [#allocation4], 512
    $region41: #{tpu_custom_call.1} parent=1 // pred_fallthru
      _
    %691 = vsyncpa [#allocation3], 1
    %692 = vsyncpa [#allocation6], 1
    %693 = vsyncpa [#allocation4], 1

</llo_original>
